<compile_context>
chip_gen: v6e
topology: v6e:2x2x1
jax: 0.10.0
libtpu: 0.0.40
codegen_flags: <defaults>
</compile_context>

<pallas_src>
import functools

import jax
import jax.numpy as jnp
from jax.experimental import pallas as pl
from jax.experimental.pallas import tpu as pltpu

LOSS_NAMES = ("level_cls", "slice_levels", "slice_cls", "volume_cls")
_LANES = 128

# Per-step lane tile.  TODO(synk): size per generation (>=4K lanes v5e,
# >=8K v6e, 16-32K v7x); 8K keeps the double-buffered footprint ~2.5 MiB.
_MAX_TILE_R = 8192


def _round_up(x, m):
    return ((x + m - 1) // m) * m


def _pick_tile(n_rows, max_tile):
    """Choose (tile_r, rpad): tile_r | rpad, both multiples of 128 lanes."""
    rpad128 = _round_up(max(n_rows, 1), _LANES)
    if rpad128 <= max_tile:
        return rpad128, rpad128
    n_blk = -(-rpad128 // max_tile)
    tile = _round_up(-(-rpad128 // n_blk), _LANES)
    return tile, tile * n_blk


def _fused_loss_kernel(aux_ref,                          # SMEM (8,) f32: w0..w3, n_vol
                       bce_p_ref, bce_y_ref,             # (f_lvl+f_slv, TILE_R)
                       scl_p_ref, scl_y_ref, scl_m_ref,  # (3,T), (3,T), (1,T)
                       vol_p_ref, vol_y_ref,             # (3, RVPAD) resident
                       out_ref,                          # SMEM (1, 5)
                       acc_ref,                          # SMEM scratch (8,) f32
                       *, f_lvl, f_slv):
    step = pl.program_id(0)
    last = pl.num_programs(0) - 1

    @pl.when(step == 0)
    def _init():
        for i in range(8):
            acc_ref[i] = jnp.float32(0.0)

    # ---- losses 0/1: masked BCE-with-logits on the packed 8-sublane slab ----
    # Rows whose label-sum == 0 (incl. zero-padded lanes) are excluded, like
    # torch's boolean-index + BCEWithLogitsLoss(mean).
    x = bce_p_ref[...].astype(jnp.float32)
    y = bce_y_ref[...].astype(jnp.float32)
    # numerically stable: max(x,0) - x*y + log1p(exp(-|x|))
    elem = jnp.maximum(x, 0.0) - x * y + jnp.log1p(jnp.exp(-jnp.abs(x)))

    y0 = y[0:f_lvl, :]
    keep0 = (jnp.sum(y0, axis=0, keepdims=True) != 0.0).astype(jnp.float32)
    acc_ref[0] += jnp.sum(elem[0:f_lvl, :] * keep0)
    acc_ref[1] += jnp.sum(keep0) * jnp.float32(f_lvl)

    y1 = y[f_lvl:f_lvl + f_slv, :]
    keep1 = (jnp.sum(y1, axis=0, keepdims=True) != 0.0).astype(jnp.float32)
    acc_ref[2] += jnp.sum(elem[f_lvl:f_lvl + f_slv, :] * keep1)
    acc_ref[3] += jnp.sum(keep1) * jnp.float32(f_slv)

    # ---- loss 2: slice_cls soft-target CE, masked by have_label ----
    xp = scl_p_ref[...].astype(jnp.float32)
    yt = scl_y_ref[...].astype(jnp.float32)
    m = scl_m_ref[...].astype(jnp.float32)
    xmax = jnp.max(xp, axis=0, keepdims=True)
    lse = jnp.log(jnp.sum(jnp.exp(xp - xmax), axis=0, keepdims=True)) + xmax
    per_row = jnp.sum(yt * (lse - xp), axis=0, keepdims=True)    # = -sum(y*logp)
    acc_ref[4] += jnp.sum(per_row * m)
    acc_ref[5] += jnp.sum(m)

    # ---- loss 3: volume_cls CE on the small resident slab, done once ----
    @pl.when(step == 0)
    def _volume():
        vp = vol_p_ref[...].astype(jnp.float32)
        vy = vol_y_ref[...].astype(jnp.float32)
        vmax = jnp.max(vp, axis=0, keepdims=True)
        vlse = jnp.log(jnp.sum(jnp.exp(vp - vmax), axis=0, keepdims=True)) + vmax
        # zero-padded rows have all-zero labels -> contribute 0 to the sum
        acc_ref[6] = jnp.sum(vy * (vlse - vp))

    @pl.when(step == last)
    def _finalize():
        n_vol = aux_ref[4]

        def fin(s, c, w):
            # empty selection: torch gives NaN then nan_to_num -> 0
            return jnp.where(c > 0.0, s / c, jnp.float32(0.0)) * w

        l0 = fin(acc_ref[0], acc_ref[1], aux_ref[0])
        l1 = fin(acc_ref[2], acc_ref[3], aux_ref[1])
        l2 = fin(acc_ref[4], acc_ref[5], aux_ref[2])
        l3 = fin(acc_ref[6], n_vol, aux_ref[3])
        out_ref[0, 0] = l0
        out_ref[0, 1] = l1
        out_ref[0, 2] = l2
        out_ref[0, 3] = l3
        out_ref[0, 4] = (l0 + l1 + l2 + l3) * jnp.float32(0.25)


def _lane_dense(x2d, rpad):
    """(R, F) -> (F, Rpad): features on sublanes, rows on the 128-lane axis,
    zero-padded so lanes are a multiple of the tile. Keeps dtype."""
    xt = x2d.T
    r = xt.shape[1]
    if rpad != r:
        xt = jnp.pad(xt, ((0, 0), (0, rpad - r)))
    return xt


@functools.partial(jax.jit, static_argnames=("max_tile_r",))
def _custom_loss_impl(pred, label, weight_arr, max_tile_r):
    f_lvl = pred["level_cls"].shape[-1]
    f_slv = pred["slice_levels"].shape[-1]
    fsum = f_lvl + f_slv

    lvl_p = pred["level_cls"].reshape(-1, f_lvl)
    slv_p = pred["slice_levels"].reshape(-1, f_slv)
    lvl_y = label["level_cls"].reshape(-1, f_lvl)
    slv_y = label["slice_levels"].reshape(-1, f_slv)
    scl_p2 = pred["slice_cls"].reshape(-1, 3)
    scl_y2 = label["slice_cls"].reshape(-1, 3)
    vol_p2 = pred["volume_cls"].reshape(-1, 3)
    vol_y2 = label["volume_cls"].reshape(-1, 3)

    n_rows = lvl_p.shape[0]
    n_vol = vol_p2.shape[0]
    tile_r, rpad = _pick_tile(n_rows, max_tile_r)
    rvpad = _round_up(max(n_vol, 1), _LANES)
    n_blk = rpad // tile_r

    # Pack the 3- and 5-feature BCE slabs into one 8-sublane slab (full vreg
    # occupancy, half the DMA streams).  XLA fuses concat+transpose+pad into
    # one copy per slab under jit; TODO(synk): emit this layout upstream.
    bce_p = _lane_dense(jnp.concatenate([lvl_p, slv_p], axis=1), rpad)
    bce_y = _lane_dense(jnp.concatenate([lvl_y, slv_y], axis=1), rpad)
    scl_p = _lane_dense(scl_p2, rpad)
    scl_y = _lane_dense(scl_y2, rpad)
    scl_m = _lane_dense(
        label["slice_have_label"].reshape(-1, 1).astype(jnp.float32), rpad)
    vol_p = _lane_dense(vol_p2, rvpad)
    vol_y = _lane_dense(vol_y2, rvpad)

    # Runtime scalars in SMEM (no recompile per weight tuple).
    aux = jnp.zeros((8,), jnp.float32)
    aux = aux.at[0:4].set(weight_arr.astype(jnp.float32))
    aux = aux.at[4].set(jnp.float32(n_vol))

    # VMEM budget: double-buffered row tiles + resident volume slabs + slack.
    def _spad(f):
        return _round_up(f, 8)

    per_step = 4 * tile_r * (2 * _spad(fsum) + 2 * _spad(3) + _spad(1))
    resident = 4 * rvpad * 2 * _spad(3)
    vmem_limit = int(min(64 * 1024 * 1024,
                         max(8 * 1024 * 1024,
                             3 * per_step + resident + (1 << 20))))

    slabs = (bce_p, bce_y, scl_p, scl_y, scl_m, vol_p, vol_y)
    bytes_accessed = int(sum(a.size * a.dtype.itemsize for a in slabs) + 8 * 4 + 5 * 4)
    n_elem = int(bce_p.size + scl_p.size + vol_p.size)
    cost = pl.CostEstimate(flops=8 * n_elem,
                           transcendentals=2 * n_elem,
                           bytes_accessed=bytes_accessed)

    kernel = functools.partial(_fused_loss_kernel, f_lvl=f_lvl, f_slv=f_slv)

    out = pl.pallas_call(
        kernel,
        out_shape=jax.ShapeDtypeStruct((1, 5), jnp.float32),
        grid_spec=pltpu.PrefetchScalarGridSpec(
            num_scalar_prefetch=0,
            grid=(n_blk,),
            in_specs=[
                pl.BlockSpec(memory_space=pltpu.MemorySpace.SMEM),   # aux scalars
                pl.BlockSpec((fsum, tile_r), lambda i: (0, i)),      # bce preds
                pl.BlockSpec((fsum, tile_r), lambda i: (0, i)),      # bce labels
                pl.BlockSpec((3, tile_r), lambda i: (0, i)),         # slice_cls preds
                pl.BlockSpec((3, tile_r), lambda i: (0, i)),         # slice_cls labels
                pl.BlockSpec((1, tile_r), lambda i: (0, i)),         # have_label mask
                pl.BlockSpec((3, rvpad), lambda i: (0, 0)),          # volume preds (resident)
                pl.BlockSpec((3, rvpad), lambda i: (0, 0)),          # volume labels (resident)
            ],
            out_specs=pl.BlockSpec(memory_space=pltpu.MemorySpace.SMEM),
            scratch_shapes=[pltpu.SMEM((8,), jnp.float32)],
        ),
        compiler_params=pltpu.CompilerParams(
            dimension_semantics=("arbitrary",),
            vmem_limit_bytes=vmem_limit),
        cost_estimate=cost,
    )(aux, bce_p, bce_y, scl_p, scl_y, scl_m, vol_p, vol_y)

    total = out[0, 4]
    per_loss = {LOSS_NAMES[i]: out[0, i] for i in range(4)}
    return total, per_loss


def custom_loss(pred, label, weight=(1.0, 1.0, 1.0, 1.0), max_tile_r=_MAX_TILE_R):
    weight_arr = jnp.asarray(weight, dtype=jnp.float32)
    return _custom_loss_impl(pred, label, weight_arr, max_tile_r=max_tile_r)


# ----------------------------------------------------------------------------
# pure-JAX reference (mirrors the PyTorch module) for correctness checking
# ----------------------------------------------------------------------------
def _reference_custom_loss(pred, label, weight=(1.0, 1.0, 1.0, 1.0)):
    def bce(p, y):
        p = p.reshape(-1, p.shape[-1]).astype(jnp.float32)
        y = y.reshape(-1, y.shape[-1]).astype(jnp.float32)
        keep = (jnp.sum(y, axis=1, keepdims=True) != 0).astype(jnp.float32)
        elem = jnp.maximum(p, 0.0) - p * y + jnp.log1p(jnp.exp(-jnp.abs(p)))
        return jnp.sum(elem * keep) / (jnp.sum(keep) * p.shape[1])

    def ce(p, y, m):
        p = p.reshape(-1, 3).astype(jnp.float32)
        y = y.reshape(-1, 3).astype(jnp.float32)
        logp = jax.nn.log_softmax(p, axis=-1)
        per_row = -jnp.sum(y * logp, axis=-1)
        if m is None:
            return jnp.mean(per_row)
        mf = m.reshape(-1).astype(jnp.float32)
        return jnp.sum(per_row * mf) / jnp.sum(mf)

    losses = jnp.stack([
        bce(pred["level_cls"], label["level_cls"]) * weight[0],
        bce(pred["slice_levels"], label["slice_levels"]) * weight[1],
        ce(pred["slice_cls"], label["slice_cls"], label["slice_have_label"]) * weight[2],
        ce(pred["volume_cls"], label["volume_cls"], None) * weight[3],
    ])
    losses = jnp.nan_to_num(losses)
    return jnp.sum(losses) / 4.0, losses


if __name__ == "__main__":
    key = jax.random.PRNGKey(0)
    ks = jax.random.split(key, 10)

    b, n, l = 2, 4, 5          # batch, num slices, num levels
    f_level = 3                # level_cls feature dim
    f_slicelv = 5              # slice_levels feature dim

    # predictions (logits)
    pred = {
        "level_cls":    jax.random.normal(ks[0], (b, n, l, f_level), jnp.float32),
        "slice_levels": jax.random.normal(ks[1], (b, n, l, f_slicelv), jnp.float32),
        "slice_cls":    jax.random.normal(ks[2], (b, n, l, 3), jnp.float32),
        "volume_cls":   jax.random.normal(ks[3], (b, l, 3), jnp.float32),
    }

    # labels: multi-hot for level losses (with some all-zero rows), one-hot for CE
    level_lbl = jax.random.bernoulli(ks[4], 0.4, (b, n, l, f_level)).astype(jnp.float32)
    slicelv_lbl = jax.random.bernoulli(ks[5], 0.4, (b, n, l, f_slicelv)).astype(jnp.float32)
    slice_cls_lbl = jax.nn.one_hot(
        jax.random.randint(ks[6], (b, n, l), 0, 3), 3, dtype=jnp.float32)
    volume_cls_lbl = jax.nn.one_hot(
        jax.random.randint(ks[7], (b, l), 0, 3), 3, dtype=jnp.float32)
    slice_have_label = jax.random.bernoulli(ks[8], 0.7, (b, n, l))

    label = {
        "level_cls": level_lbl,
        "slice_levels": slicelv_lbl,
        "slice_cls": slice_cls_lbl,
        "volume_cls": volume_cls_lbl,
        "slice_have_label": slice_have_label,
    }

    total, per_loss = custom_loss(pred, label)
    total = jax.block_until_ready(total)
    per_loss = {k: jax.block_until_ready(v) for k, v in per_loss.items()}

    ref_total, ref_losses = _reference_custom_loss(pred, label)
    ref_total = jax.block_until_ready(ref_total)

    assert jnp.isfinite(total), "total loss is not finite"
    assert jnp.allclose(total, ref_total, atol=2e-5), (float(total), float(ref_total))
    for i, name in enumerate(LOSS_NAMES):
        assert jnp.allclose(per_loss[name], ref_losses[i], atol=2e-5), (
            name, float(per_loss[name]), float(ref_losses[i]))

    # exercise the multi-block row-grid path as well (small tile -> several steps)
    total2, _ = custom_loss(pred, label, max_tile_r=128)
    total2 = jax.block_until_ready(total2)
    assert jnp.allclose(total2, ref_total, atol=2e-5), (float(total2), float(ref_total))

    print("KERNEL_OK")
</pallas_src>

<mosaic_0001>
module attributes {stable_mosaic.version = 11 : i64} {
  func.func @_fused_loss_kernel(%arg0: i32, %arg1: memref<8xf32, #tpu.memory_space<smem>>, %arg2: memref<8x128xf32, #tpu.memory_space<vmem>>, %arg3: memref<8x128xf32, #tpu.memory_space<vmem>>, %arg4: memref<3x128xf32, #tpu.memory_space<vmem>>, %arg5: memref<3x128xf32, #tpu.memory_space<vmem>>, %arg6: memref<1x128xf32, #tpu.memory_space<vmem>>, %arg7: memref<3x128xf32, #tpu.memory_space<vmem>>, %arg8: memref<3x128xf32, #tpu.memory_space<vmem>>, %arg9: memref<1x5xf32, #tpu.memory_space<smem>>, %arg10: memref<8xf32, #tpu.memory_space<smem>>) attributes {dimension_semantics = [#tpu.dimension_semantics<arbitrary>], iteration_bounds = array<i64: 1>, scalar_prefetch = 0 : i64, scratch_operands = 1 : i64, tpu.core_type = #tpu.core_type<tc>, window_params = [{transform_indices = @transform_0, window_bounds = array<i64: 8>}, {transform_indices = @transform_1, window_bounds = array<i64: 8, 128>}, {transform_indices = @transform_2, window_bounds = array<i64: 8, 128>}, {transform_indices = @transform_3, window_bounds = array<i64: 3, 128>}, {transform_indices = @transform_4, window_bounds = array<i64: 3, 128>}, {transform_indices = @transform_5, window_bounds = array<i64: 1, 128>}, {pipeline_mode = #tpu.pipeline_mode<synchronous>, transform_indices = @transform_6, window_bounds = array<i64: 3, 128>}, {pipeline_mode = #tpu.pipeline_mode<synchronous>, transform_indices = @transform_7, window_bounds = array<i64: 3, 128>}, {transform_indices = @transform_8, window_bounds = array<i64: 1, 5>}]} {
    %c0_i32 = arith.constant 0 : i32
    %0 = arith.cmpi eq, %arg0, %c0_i32 : i32
    %1 = arith.extui %0 : i1 to i32
    %c0_i32_0 = arith.constant 0 : i32
    %2 = arith.cmpi ne, %1, %c0_i32_0 : i32
    scf.if %2 {
      %cst_37 = arith.constant 0.000000e+00 : f32
      %c0_38 = arith.constant 0 : index
      %103 = memref.load %arg10[%c0_38] : memref<8xf32, #tpu.memory_space<smem>>
      memref.store %cst_37, %arg10[%c0_38] : memref<8xf32, #tpu.memory_space<smem>>
      %cst_39 = arith.constant 0.000000e+00 : f32
      %c1_40 = arith.constant 1 : index
      %104 = memref.load %arg10[%c1_40] : memref<8xf32, #tpu.memory_space<smem>>
      memref.store %cst_39, %arg10[%c1_40] : memref<8xf32, #tpu.memory_space<smem>>
      %cst_41 = arith.constant 0.000000e+00 : f32
      %c2_42 = arith.constant 2 : index
      %105 = memref.load %arg10[%c2_42] : memref<8xf32, #tpu.memory_space<smem>>
      memref.store %cst_41, %arg10[%c2_42] : memref<8xf32, #tpu.memory_space<smem>>
      %cst_43 = arith.constant 0.000000e+00 : f32
      %c3_44 = arith.constant 3 : index
      %106 = memref.load %arg10[%c3_44] : memref<8xf32, #tpu.memory_space<smem>>
      memref.store %cst_43, %arg10[%c3_44] : memref<8xf32, #tpu.memory_space<smem>>
      %cst_45 = arith.constant 0.000000e+00 : f32
      %c4_46 = arith.constant 4 : index
      %107 = memref.load %arg10[%c4_46] : memref<8xf32, #tpu.memory_space<smem>>
      memref.store %cst_45, %arg10[%c4_46] : memref<8xf32, #tpu.memory_space<smem>>
      %cst_47 = arith.constant 0.000000e+00 : f32
      %c5_48 = arith.constant 5 : index
      %108 = memref.load %arg10[%c5_48] : memref<8xf32, #tpu.memory_space<smem>>
      memref.store %cst_47, %arg10[%c5_48] : memref<8xf32, #tpu.memory_space<smem>>
      %cst_49 = arith.constant 0.000000e+00 : f32
      %c6 = arith.constant 6 : index
      %109 = memref.load %arg10[%c6] : memref<8xf32, #tpu.memory_space<smem>>
      memref.store %cst_49, %arg10[%c6] : memref<8xf32, #tpu.memory_space<smem>>
      %cst_50 = arith.constant 0.000000e+00 : f32
      %c7 = arith.constant 7 : index
      %110 = memref.load %arg10[%c7] : memref<8xf32, #tpu.memory_space<smem>>
      memref.store %cst_50, %arg10[%c7] : memref<8xf32, #tpu.memory_space<smem>>
    } else {
    }
    %c0 = arith.constant 0 : index
    %c0_1 = arith.constant 0 : index
    %3 = vector.load %arg2[%c0, %c0_1] : memref<8x128xf32, #tpu.memory_space<vmem>>, vector<8x128xf32>
    %c0_2 = arith.constant 0 : index
    %c0_3 = arith.constant 0 : index
    %4 = vector.load %arg3[%c0_2, %c0_3] : memref<8x128xf32, #tpu.memory_space<vmem>>, vector<8x128xf32>
    %cst = arith.constant 0.000000e+00 : f32
    %5 = vector.broadcast %cst : f32 to vector<8x128xf32>
    %6 = arith.maximumf %3, %5 : vector<8x128xf32>
    %7 = arith.mulf %3, %4 : vector<8x128xf32>
    %8 = arith.subf %6, %7 : vector<8x128xf32>
    %9 = math.absf %3 : vector<8x128xf32>
    %cst_4 = arith.constant 0.000000e+00 : f32
    %10 = vector.broadcast %cst_4 : f32 to vector<8x128xf32>
    %11 = arith.subf %10, %9 : vector<8x128xf32>
    %12 = math.exp %11 : vector<8x128xf32>
    %13 = math.log1p %12 : vector<8x128xf32>
    %14 = arith.addf %8, %13 : vector<8x128xf32>
    %15 = vector.extract_strided_slice %4 {offsets = [0, 0], sizes = [3, 128], strides = [1, 1]} : vector<8x128xf32> to vector<3x128xf32>
    %cst_5 = arith.constant dense<0.000000e+00> : vector<128xf32>
    %16 = vector.multi_reduction <add>, %15, %cst_5 [0] : vector<3x128xf32> to vector<128xf32>
    %17 = vector.shape_cast %16 : vector<128xf32> to vector<1x128xf32>
    %cst_6 = arith.constant 0.000000e+00 : f32
    %18 = vector.broadcast %cst_6 : f32 to vector<1x128xf32>
    %19 = arith.cmpf one, %17, %18 : vector<1x128xf32>
    %20 = arith.extui %19 : vector<1x128xi1> to vector<1x128xi32>
    %21 = arith.sitofp %20 : vector<1x128xi32> to vector<1x128xf32>
    %c0_7 = arith.constant 0 : index
    %22 = memref.load %arg10[%c0_7] : memref<8xf32, #tpu.memory_space<smem>>
    %23 = vector.extract_strided_slice %14 {offsets = [0, 0], sizes = [3, 128], strides = [1, 1]} : vector<8x128xf32> to vector<3x128xf32>
    %24 = vector.broadcast %21 : vector<1x128xf32> to vector<3x128xf32>
    %25 = arith.mulf %23, %24 : vector<3x128xf32>
    %26 = vector.shape_cast %25 : vector<3x128xf32> to vector<1x3x128xf32>
    %cst_8 = arith.constant dense<0.000000e+00> : vector<1xf32>
    %27 = vector.multi_reduction <add>, %26, %cst_8 [1, 2] : vector<1x3x128xf32> to vector<1xf32>
    %28 = vector.shape_cast %27 : vector<1xf32> to vector<1x1x1xf32>
    %29 = vector.extract %28[0, 0, 0] : f32 from vector<1x1x1xf32>
    %30 = arith.addf %22, %29 : f32
    %c0_9 = arith.constant 0 : index
    %31 = memref.load %arg10[%c0_9] : memref<8xf32, #tpu.memory_space<smem>>
    memref.store %30, %arg10[%c0_9] : memref<8xf32, #tpu.memory_space<smem>>
    %c1 = arith.constant 1 : index
    %32 = memref.load %arg10[%c1] : memref<8xf32, #tpu.memory_space<smem>>
    %33 = vector.shape_cast %21 : vector<1x128xf32> to vector<1x1x128xf32>
    %cst_10 = arith.constant dense<0.000000e+00> : vector<1xf32>
    %34 = vector.multi_reduction <add>, %33, %cst_10 [1, 2] : vector<1x1x128xf32> to vector<1xf32>
    %35 = vector.shape_cast %34 : vector<1xf32> to vector<1x1x1xf32>
    %36 = vector.extract %35[0, 0, 0] : f32 from vector<1x1x1xf32>
    %cst_11 = arith.constant 3.000000e+00 : f32
    %37 = arith.mulf %36, %cst_11 : f32
    %38 = arith.addf %32, %37 : f32
    %c1_12 = arith.constant 1 : index
    %39 = memref.load %arg10[%c1_12] : memref<8xf32, #tpu.memory_space<smem>>
    memref.store %38, %arg10[%c1_12] : memref<8xf32, #tpu.memory_space<smem>>
    %40 = vector.extract_strided_slice %4 {offsets = [3, 0], sizes = [5, 128], strides = [1, 1]} : vector<8x128xf32> to vector<5x128xf32>
    %cst_13 = arith.constant dense<0.000000e+00> : vector<128xf32>
    %41 = vector.multi_reduction <add>, %40, %cst_13 [0] : vector<5x128xf32> to vector<128xf32>
    %42 = vector.shape_cast %41 : vector<128xf32> to vector<1x128xf32>
    %cst_14 = arith.constant 0.000000e+00 : f32
    %43 = vector.broadcast %cst_14 : f32 to vector<1x128xf32>
    %44 = arith.cmpf one, %42, %43 : vector<1x128xf32>
    %45 = arith.extui %44 : vector<1x128xi1> to vector<1x128xi32>
    %46 = arith.sitofp %45 : vector<1x128xi32> to vector<1x128xf32>
    %c2 = arith.constant 2 : index
    %47 = memref.load %arg10[%c2] : memref<8xf32, #tpu.memory_space<smem>>
    %48 = vector.extract_strided_slice %14 {offsets = [3, 0], sizes = [5, 128], strides = [1, 1]} : vector<8x128xf32> to vector<5x128xf32>
    %49 = vector.broadcast %46 : vector<1x128xf32> to vector<5x128xf32>
    %50 = arith.mulf %48, %49 : vector<5x128xf32>
    %51 = vector.shape_cast %50 : vector<5x128xf32> to vector<1x5x128xf32>
    %cst_15 = arith.constant dense<0.000000e+00> : vector<1xf32>
    %52 = vector.multi_reduction <add>, %51, %cst_15 [1, 2] : vector<1x5x128xf32> to vector<1xf32>
    %53 = vector.shape_cast %52 : vector<1xf32> to vector<1x1x1xf32>
    %54 = vector.extract %53[0, 0, 0] : f32 from vector<1x1x1xf32>
    %55 = arith.addf %47, %54 : f32
    %c2_16 = arith.constant 2 : index
    %56 = memref.load %arg10[%c2_16] : memref<8xf32, #tpu.memory_space<smem>>
    memref.store %55, %arg10[%c2_16] : memref<8xf32, #tpu.memory_space<smem>>
    %c3 = arith.constant 3 : index
    %57 = memref.load %arg10[%c3] : memref<8xf32, #tpu.memory_space<smem>>
    %58 = vector.shape_cast %46 : vector<1x128xf32> to vector<1x1x128xf32>
    %cst_17 = arith.constant dense<0.000000e+00> : vector<1xf32>
    %59 = vector.multi_reduction <add>, %58, %cst_17 [1, 2] : vector<1x1x128xf32> to vector<1xf32>
    %60 = vector.shape_cast %59 : vector<1xf32> to vector<1x1x1xf32>
    %61 = vector.extract %60[0, 0, 0] : f32 from vector<1x1x1xf32>
    %cst_18 = arith.constant 5.000000e+00 : f32
    %62 = arith.mulf %61, %cst_18 : f32
    %63 = arith.addf %57, %62 : f32
    %c3_19 = arith.constant 3 : index
    %64 = memref.load %arg10[%c3_19] : memref<8xf32, #tpu.memory_space<smem>>
    memref.store %63, %arg10[%c3_19] : memref<8xf32, #tpu.memory_space<smem>>
    %c0_20 = arith.constant 0 : index
    %c0_21 = arith.constant 0 : index
    %65 = vector.load %arg4[%c0_20, %c0_21] : memref<3x128xf32, #tpu.memory_space<vmem>>, vector<3x128xf32>
    %c0_22 = arith.constant 0 : index
    %c0_23 = arith.constant 0 : index
    %66 = vector.load %arg5[%c0_22, %c0_23] : memref<3x128xf32, #tpu.memory_space<vmem>>, vector<3x128xf32>
    %c0_24 = arith.constant 0 : index
    %c0_25 = arith.constant 0 : index
    %67 = vector.load %arg6[%c0_24, %c0_25] : memref<1x128xf32, #tpu.memory_space<vmem>>, vector<1x128xf32>
    %cst_26 = arith.constant dense<0xFF800000> : vector<128xf32>
    %68 = vector.multi_reduction <maximumf>, %65, %cst_26 [0] : vector<3x128xf32> to vector<128xf32>
    %69 = vector.shape_cast %68 : vector<128xf32> to vector<1x128xf32>
    %70 = vector.broadcast %69 : vector<1x128xf32> to vector<3x128xf32>
    %71 = arith.subf %65, %70 : vector<3x128xf32>
    %72 = math.exp %71 : vector<3x128xf32>
    %cst_27 = arith.constant dense<0.000000e+00> : vector<128xf32>
    %73 = vector.multi_reduction <add>, %72, %cst_27 [0] : vector<3x128xf32> to vector<128xf32>
    %74 = vector.shape_cast %73 : vector<128xf32> to vector<1x128xf32>
    %75 = math.log %74 : vector<1x128xf32>
    %76 = arith.addf %75, %69 : vector<1x128xf32>
    %77 = vector.broadcast %76 : vector<1x128xf32> to vector<3x128xf32>
    %78 = arith.subf %77, %65 : vector<3x128xf32>
    %79 = arith.mulf %66, %78 : vector<3x128xf32>
    %cst_28 = arith.constant dense<0.000000e+00> : vector<128xf32>
    %80 = vector.multi_reduction <add>, %79, %cst_28 [0] : vector<3x128xf32> to vector<128xf32>
    %81 = vector.shape_cast %80 : vector<128xf32> to vector<1x128xf32>
    %c4 = arith.constant 4 : index
    %82 = memref.load %arg10[%c4] : memref<8xf32, #tpu.memory_space<smem>>
    %83 = arith.mulf %81, %67 : vector<1x128xf32>
    %84 = vector.shape_cast %83 : vector<1x128xf32> to vector<1x1x128xf32>
    %cst_29 = arith.constant dense<0.000000e+00> : vector<1xf32>
    %85 = vector.multi_reduction <add>, %84, %cst_29 [1, 2] : vector<1x1x128xf32> to vector<1xf32>
    %86 = vector.shape_cast %85 : vector<1xf32> to vector<1x1x1xf32>
    %87 = vector.extract %86[0, 0, 0] : f32 from vector<1x1x1xf32>
    %88 = arith.addf %82, %87 : f32
    %c4_30 = arith.constant 4 : index
    %89 = memref.load %arg10[%c4_30] : memref<8xf32, #tpu.memory_space<smem>>
    memref.store %88, %arg10[%c4_30] : memref<8xf32, #tpu.memory_space<smem>>
    %c5 = arith.constant 5 : index
    %90 = memref.load %arg10[%c5] : memref<8xf32, #tpu.memory_space<smem>>
    %91 = vector.shape_cast %67 : vector<1x128xf32> to vector<1x1x128xf32>
    %cst_31 = arith.constant dense<0.000000e+00> : vector<1xf32>
    %92 = vector.multi_reduction <add>, %91, %cst_31 [1, 2] : vector<1x1x128xf32> to vector<1xf32>
    %93 = vector.shape_cast %92 : vector<1xf32> to vector<1x1x1xf32>
    %94 = vector.extract %93[0, 0, 0] : f32 from vector<1x1x1xf32>
    %95 = arith.addf %90, %94 : f32
    %c5_32 = arith.constant 5 : index
    %96 = memref.load %arg10[%c5_32] : memref<8xf32, #tpu.memory_space<smem>>
    memref.store %95, %arg10[%c5_32] : memref<8xf32, #tpu.memory_space<smem>>
    %c0_i32_33 = arith.constant 0 : i32
    %97 = arith.cmpi eq, %arg0, %c0_i32_33 : i32
    %98 = arith.extui %97 : i1 to i32
    %c0_i32_34 = arith.constant 0 : i32
    %99 = arith.cmpi ne, %98, %c0_i32_34 : i32
    scf.if %99 {
      %c0_37 = arith.constant 0 : index
      %c0_38 = arith.constant 0 : index
      %103 = vector.load %arg7[%c0_37, %c0_38] : memref<3x128xf32, #tpu.memory_space<vmem>>, vector<3x128xf32>
      %c0_39 = arith.constant 0 : index
      %c0_40 = arith.constant 0 : index
      %104 = vector.load %arg8[%c0_39, %c0_40] : memref<3x128xf32, #tpu.memory_space<vmem>>, vector<3x128xf32>
      %cst_41 = arith.constant dense<0xFF800000> : vector<128xf32>
      %105 = vector.multi_reduction <maximumf>, %103, %cst_41 [0] : vector<3x128xf32> to vector<128xf32>
      %106 = vector.shape_cast %105 : vector<128xf32> to vector<1x128xf32>
      %107 = vector.broadcast %106 : vector<1x128xf32> to vector<3x128xf32>
      %108 = arith.subf %103, %107 : vector<3x128xf32>
      %109 = math.exp %108 : vector<3x128xf32>
      %cst_42 = arith.constant dense<0.000000e+00> : vector<128xf32>
      %110 = vector.multi_reduction <add>, %109, %cst_42 [0] : vector<3x128xf32> to vector<128xf32>
      %111 = vector.shape_cast %110 : vector<128xf32> to vector<1x128xf32>
      %112 = math.log %111 : vector<1x128xf32>
      %113 = arith.addf %112, %106 : vector<1x128xf32>
      %114 = vector.broadcast %113 : vector<1x128xf32> to vector<3x128xf32>
      %115 = arith.subf %114, %103 : vector<3x128xf32>
      %116 = arith.mulf %104, %115 : vector<3x128xf32>
      %117 = vector.shape_cast %116 : vector<3x128xf32> to vector<1x3x128xf32>
      %cst_43 = arith.constant dense<0.000000e+00> : vector<1xf32>
      %118 = vector.multi_reduction <add>, %117, %cst_43 [1, 2] : vector<1x3x128xf32> to vector<1xf32>
      %119 = vector.shape_cast %118 : vector<1xf32> to vector<1x1x1xf32>
      %120 = vector.extract %119[0, 0, 0] : f32 from vector<1x1x1xf32>
      %c6 = arith.constant 6 : index
      %121 = memref.load %arg10[%c6] : memref<8xf32, #tpu.memory_space<smem>>
      memref.store %120, %arg10[%c6] : memref<8xf32, #tpu.memory_space<smem>>
    } else {
    }
    %c0_i32_35 = arith.constant 0 : i32
    %100 = arith.cmpi eq, %arg0, %c0_i32_35 : i32
    %101 = arith.extui %100 : i1 to i32
    %c0_i32_36 = arith.constant 0 : i32
    %102 = arith.cmpi ne, %101, %c0_i32_36 : i32
    scf.if %102 {
      %c4_37 = arith.constant 4 : index
      %103 = memref.load %arg1[%c4_37] : memref<8xf32, #tpu.memory_space<smem>>
      %c0_38 = arith.constant 0 : index
      %104 = memref.load %arg10[%c0_38] : memref<8xf32, #tpu.memory_space<smem>>
      %c1_39 = arith.constant 1 : index
      %105 = memref.load %arg10[%c1_39] : memref<8xf32, #tpu.memory_space<smem>>
      %c0_40 = arith.constant 0 : index
      %106 = memref.load %arg1[%c0_40] : memref<8xf32, #tpu.memory_space<smem>>
      %cst_41 = arith.constant 0.000000e+00 : f32
      %107 = arith.cmpf ogt, %105, %cst_41 : f32
      %108 = arith.divf %104, %105 : f32
      %cst_42 = arith.constant 0.000000e+00 : f32
      %109 = arith.select %107, %108, %cst_42 : f32
      %110 = arith.mulf %109, %106 : f32
      %c2_43 = arith.constant 2 : index
      %111 = memref.load %arg10[%c2_43] : memref<8xf32, #tpu.memory_space<smem>>
      %c3_44 = arith.constant 3 : index
      %112 = memref.load %arg10[%c3_44] : memref<8xf32, #tpu.memory_space<smem>>
      %c1_45 = arith.constant 1 : index
      %113 = memref.load %arg1[%c1_45] : memref<8xf32, #tpu.memory_space<smem>>
      %cst_46 = arith.constant 0.000000e+00 : f32
      %114 = arith.cmpf ogt, %112, %cst_46 : f32
      %115 = arith.divf %111, %112 : f32
      %cst_47 = arith.constant 0.000000e+00 : f32
      %116 = arith.select %114, %115, %cst_47 : f32
      %117 = arith.mulf %116, %113 : f32
      %c4_48 = arith.constant 4 : index
      %118 = memref.load %arg10[%c4_48] : memref<8xf32, #tpu.memory_space<smem>>
      %c5_49 = arith.constant 5 : index
      %119 = memref.load %arg10[%c5_49] : memref<8xf32, #tpu.memory_space<smem>>
      %c2_50 = arith.constant 2 : index
      %120 = memref.load %arg1[%c2_50] : memref<8xf32, #tpu.memory_space<smem>>
      %cst_51 = arith.constant 0.000000e+00 : f32
      %121 = arith.cmpf ogt, %119, %cst_51 : f32
      %122 = arith.divf %118, %119 : f32
      %cst_52 = arith.constant 0.000000e+00 : f32
      %123 = arith.select %121, %122, %cst_52 : f32
      %124 = arith.mulf %123, %120 : f32
      %c6 = arith.constant 6 : index
      %125 = memref.load %arg10[%c6] : memref<8xf32, #tpu.memory_space<smem>>
      %c3_53 = arith.constant 3 : index
      %126 = memref.load %arg1[%c3_53] : memref<8xf32, #tpu.memory_space<smem>>
      %cst_54 = arith.constant 0.000000e+00 : f32
      %127 = arith.cmpf ogt, %103, %cst_54 : f32
      %128 = arith.divf %125, %103 : f32
      %cst_55 = arith.constant 0.000000e+00 : f32
      %129 = arith.select %127, %128, %cst_55 : f32
      %130 = arith.mulf %129, %126 : f32
      %c0_56 = arith.constant 0 : index
      %c0_57 = arith.constant 0 : index
      %131 = memref.load %arg9[%c0_56, %c0_57] : memref<1x5xf32, #tpu.memory_space<smem>>
      memref.store %110, %arg9[%c0_56, %c0_57] : memref<1x5xf32, #tpu.memory_space<smem>>
      %c0_58 = arith.constant 0 : index
      %c1_59 = arith.constant 1 : index
      %132 = memref.load %arg9[%c0_58, %c1_59] : memref<1x5xf32, #tpu.memory_space<smem>>
      memref.store %117, %arg9[%c0_58, %c1_59] : memref<1x5xf32, #tpu.memory_space<smem>>
      %c0_60 = arith.constant 0 : index
      %c2_61 = arith.constant 2 : index
      %133 = memref.load %arg9[%c0_60, %c2_61] : memref<1x5xf32, #tpu.memory_space<smem>>
      memref.store %124, %arg9[%c0_60, %c2_61] : memref<1x5xf32, #tpu.memory_space<smem>>
      %c0_62 = arith.constant 0 : index
      %c3_63 = arith.constant 3 : index
      %134 = memref.load %arg9[%c0_62, %c3_63] : memref<1x5xf32, #tpu.memory_space<smem>>
      memref.store %130, %arg9[%c0_62, %c3_63] : memref<1x5xf32, #tpu.memory_space<smem>>
      %135 = arith.addf %110, %117 : f32
      %136 = arith.addf %135, %124 : f32
      %137 = arith.addf %136, %130 : f32
      %cst_64 = arith.constant 2.500000e-01 : f32
      %138 = arith.mulf %137, %cst_64 : f32
      %c0_65 = arith.constant 0 : index
      %c4_66 = arith.constant 4 : index
      %139 = memref.load %arg9[%c0_65, %c4_66] : memref<1x5xf32, #tpu.memory_space<smem>>
      memref.store %138, %arg9[%c0_65, %c4_66] : memref<1x5xf32, #tpu.memory_space<smem>>
    } else {
    }
    return
  }
  func.func @transform_0(%arg0: i32) -> i32 {
    %c0_i32 = arith.constant 0 : i32
    %c0_i32_0 = arith.constant 0 : i32
    return %c0_i32 : i32
  }
  func.func @transform_1(%arg0: i32) -> (i32, i32) {
    %c0_i32 = arith.constant 0 : i32
    %c0_i32_0 = arith.constant 0 : i32
    return %c0_i32, %arg0 : i32, i32
  }
  func.func @transform_2(%arg0: i32) -> (i32, i32) {
    %c0_i32 = arith.constant 0 : i32
    %c0_i32_0 = arith.constant 0 : i32
    return %c0_i32, %arg0 : i32, i32
  }
  func.func @transform_3(%arg0: i32) -> (i32, i32) {
    %c0_i32 = arith.constant 0 : i32
    %c0_i32_0 = arith.constant 0 : i32
    return %c0_i32, %arg0 : i32, i32
  }
  func.func @transform_4(%arg0: i32) -> (i32, i32) {
    %c0_i32 = arith.constant 0 : i32
    %c0_i32_0 = arith.constant 0 : i32
    return %c0_i32, %arg0 : i32, i32
  }
  func.func @transform_5(%arg0: i32) -> (i32, i32) {
    %c0_i32 = arith.constant 0 : i32
    %c0_i32_0 = arith.constant 0 : i32
    return %c0_i32, %arg0 : i32, i32
  }
  func.func @transform_6(%arg0: i32) -> (i32, i32) {
    %c0_i32 = arith.constant 0 : i32
    %c0_i32_0 = arith.constant 0 : i32
    %c0_i32_1 = arith.constant 0 : i32
    return %c0_i32, %c0_i32_0 : i32, i32
  }
  func.func @transform_7(%arg0: i32) -> (i32, i32) {
    %c0_i32 = arith.constant 0 : i32
    %c0_i32_0 = arith.constant 0 : i32
    %c0_i32_1 = arith.constant 0 : i32
    return %c0_i32, %c0_i32_0 : i32, i32
  }
  func.func @transform_8(%arg0: i32) -> (i32, i32) {
    %c0_i32 = arith.constant 0 : i32
    %c0_i32_0 = arith.constant 0 : i32
    %c0_i32_1 = arith.constant 0 : i32
    return %c0_i32, %c0_i32_0 : i32, i32
  }
}

</mosaic_0001>

<llo_original>
// kernel: _custom_loss_impl.1
$region0: #{_custom_loss_impl.1}
  #allocation0 [shape = 'u32[]', space=smem, size = 0x4, offset = 0x4, fixed_abs, tag = 'smem constant byte address 0x4 - core index']
  #allocation1 [shape = 'u32[144,128]{1,0:T(1,128)}', space=vmem, size = 0x12000, scoped, tag = 'internal scratch']
  #allocation2 [shape = 'f32[8]{0:T(128)}', space=smem, size = 0x200, scoped, tag = 'scratch operand']
  %s0 = inlined_call_operand.vmem [shape: f32[8], index: 0, kind: input, shape index: {}]
  %s1 = inlined_call_operand.vmem [shape: f32[8,128], index: 1, kind: input, shape index: {}]
  %s2 = inlined_call_operand.vmem [shape: f32[8,128], index: 2, kind: input, shape index: {}]
  %s3 = inlined_call_operand.vmem [shape: f32[3,128], index: 3, kind: input, shape index: {}]
  %s4 = inlined_call_operand.vmem [shape: f32[3,128], index: 4, kind: input, shape index: {}]
  %s5 = inlined_call_operand.vmem [shape: f32[1,128], index: 5, kind: input, shape index: {}]
  %s6 = inlined_call_operand.vmem [shape: f32[3,128], index: 6, kind: input, shape index: {}]
  %s7 = inlined_call_operand.vmem [shape: f32[3,128], index: 7, kind: input, shape index: {}]
  %s8 = inlined_call_operand.vmem [shape: f32[1,5], index: 8, kind: output, shape index: {}]
  %s9 = sld [smem:[#allocation0]]
  $region54: #{_custom_loss_impl.1} parent=0
    _
  %s11 = ssub.s32 1, %s9
  %s12 = scalar_select 0, %s11, %s9
  $region1: #{_custom_loss_impl.1} parent=0
    #allocation3 [shape = 'u8[512]{0}', space=smem, size = 0x200, scoped, tag = 'input window, operand 0, single buffered']
    #allocation4 [shape = 's32[1]{0}', space=sflag, size = 0x4, scoped, tag = 'scoped memory for _custom_loss_impl.1']
    #allocation5 [shape = 's32[1]{0}', space=sflag, size = 0x4, scoped, tag = 'scoped memory for _custom_loss_impl.1']
    #allocation6 [shape = 'u8[512]{0}', space=smem, size = 0x200, scoped, tag = 'output window, operand 0, single buffered']
    %13 = vsyncpa [#allocation4], 0
    %14 = vsyncpa [#allocation5], 0
    // Predicated region
    $region2: #{_custom_loss_impl.1} parent=1 // pred_check
      _
    $region3: #{_custom_loss_impl.1} parent=1 // pred_check_branch
      %16 = sbr.rel (0) target = $region5
    $region4: #{_custom_loss_impl.1} parent=1 // pred_region
      %s18 = ssub.s32 16, 16
      %19 = vsyncadd [#allocation4], %s18
      %s21 = sshll.u32 %s0, 4
      %s22 = int_to_ptr.vmem [resolvable:$true] %s21
      %24 = dma.vmem_to_smem %s22, 16, [#allocation3], [#allocation4]
    $region5: #{_custom_loss_impl.1} parent=1 // pred_fallthru
      _
    // Predicated region
    $region6: #{_custom_loss_impl.1} parent=1 // pred_check
      _
    $region7: #{_custom_loss_impl.1} parent=1 // pred_check_branch
      %26 = sbr.rel (0) target = $region9
    $region8: #{_custom_loss_impl.1} parent=1 // pred_region
      _
    $region9: #{_custom_loss_impl.1} parent=1 // pred_fallthru
      _
    // Predicated region
    $region10: #{_custom_loss_impl.1} parent=1 // pred_check
      _
    $region11: #{_custom_loss_impl.1} parent=1 // pred_check_branch
      %28 = sbr.rel (0) target = $region13
    $region12: #{_custom_loss_impl.1} parent=1 // pred_region
      _
    $region13: #{_custom_loss_impl.1} parent=1 // pred_fallthru
      _
    // Predicated region
    $region14: #{_custom_loss_impl.1} parent=1 // pred_check
      _
    $region15: #{_custom_loss_impl.1} parent=1 // pred_check_branch
      %30 = sbr.rel (0) target = $region17
    $region16: #{_custom_loss_impl.1} parent=1 // pred_region
      _
    $region17: #{_custom_loss_impl.1} parent=1 // pred_fallthru
      _
    // Predicated region
    $region18: #{_custom_loss_impl.1} parent=1 // pred_check
      _
    $region19: #{_custom_loss_impl.1} parent=1 // pred_check_branch
      %32 = sbr.rel (0) target = $region21
    $region20: #{_custom_loss_impl.1} parent=1 // pred_region
      _
    $region21: #{_custom_loss_impl.1} parent=1 // pred_fallthru
      _
    // Predicated region
    $region22: #{_custom_loss_impl.1} parent=1 // pred_check
      _
    $region23: #{_custom_loss_impl.1} parent=1 // pred_check_branch
      %34 = sbr.rel (0) target = $region25
    $region24: #{_custom_loss_impl.1} parent=1 // pred_region
      _
    $region25: #{_custom_loss_impl.1} parent=1 // pred_fallthru
      _
    // Predicated region
    $region26: #{_custom_loss_impl.1} parent=1 // pred_check
      _
    $region27: #{_custom_loss_impl.1} parent=1 // pred_check_branch
      %36 = sbr.rel (0) target = $region29
    $region28: #{_custom_loss_impl.1} parent=1 // pred_region
      _
    $region29: #{_custom_loss_impl.1} parent=1 // pred_fallthru
      _
    // Predicated region
    $region30: #{_custom_loss_impl.1} parent=1 // pred_check
      _
    $region31: #{_custom_loss_impl.1} parent=1 // pred_check_branch
      %38 = sbr.rel (0) target = $region33
    $region32: #{_custom_loss_impl.1} parent=1 // pred_region
      _
    $region33: #{_custom_loss_impl.1} parent=1 // pred_fallthru
      _
    // Predicated region
    $region34: #{_custom_loss_impl.1} parent=1 // pred_check
      _
    $region35: #{_custom_loss_impl.1} parent=1 // pred_check_branch
      %40 = sbr.rel (0) target = $region37
    $region36: #{_custom_loss_impl.1} parent=1 // pred_region
      %41 = dma.done [#allocation4], 16
    $region37: #{_custom_loss_impl.1} parent=1 // pred_fallthru
      _
    %42 = sfence
    %p43 = scmp.eq.s32.totalorder 0, 0
    // Predicated region
    $region38: #{_custom_loss_impl.1} parent=1 // pred_check
      %p44 = pneg %p43
    $region39: #{_custom_loss_impl.1} parent=1 // pred_check_branch
      %46 = sbr.rel (%p44) target = $region41
    $region40: #{_custom_loss_impl.1} parent=1 // pred_region
      %s47 = scalar_lea.smem [#allocation2], 0
      %48 = sst [smem:[%s47]] 0.0
      %s49 = scalar_lea.smem [#allocation2], 1
      %50 = sst [smem:[%s49]] 0.0
      %s51 = scalar_lea.smem [#allocation2], 2
      %52 = sst [smem:[%s51]] 0.0
      %s53 = scalar_lea.smem [#allocation2], 3
      %54 = sst [smem:[%s53]] 0.0
      %s55 = scalar_lea.smem [#allocation2], 4
      %56 = sst [smem:[%s55]] 0.0
      %s57 = scalar_lea.smem [#allocation2], 5
      %58 = sst [smem:[%s57]] 0.0
      %s59 = scalar_lea.smem [#allocation2], 6
      %60 = sst [smem:[%s59]] 0.0
      %s61 = scalar_lea.smem [#allocation2], 7
      %62 = sst [smem:[%s61]] 0.0
    $region41: #{_custom_loss_impl.1} parent=1 // pred_fallthru
      _
    %v63 = vld [vmem:[%s1] sm:$0xff]
    %v64 = vld [vmem:[%s2] sm:$0xff]
    %v65 = vmax.f32 %v63, 0.0
    %v66 = vmul.f32 %v63, %v64
    %v67 = vsub.f32 %v65, %v66
    %v68 = vand.u32 2147483647, %v63
    %v69 = vsub.f32 0.0, %v68
    %v70 = vmul.f32 %v69, 1.442695
    %v71 = vpow.pop %v70
    %v72 = vadd.f32 %v71, 1.0
    %v73 = vlog2.pop %v72
    %v74 = vmul.f32 %v73, 0.6931472
    %v75 = vmul.f32 -0.5, %v71
    %v76 = vadd.f32 %v75, 1.0
    %v77 = vmul.f32 %v76, %v71
    %v78 = vand.u32 2147483647, %v71
    %vm79 = vcmp.lt.f32.partialorder %v78, 0.0004427343
    %v80 = vsel %vm79, %v77, %v74
    %v81 = vadd.f32 %v67, %v80
    %vm82 = vcmask 1042432
    %v83 = vsel %vm82, %v64, 0.0
    %v84 = vrot.slane %v83, 4
    %v85 = vadd.f32 %v83, %v84
    %v86 = vrot.slane %v85, 2
    %v87 = vadd.f32 %v85, %v86
    %v88 = vrot.slane %v87, 1
    %v89 = vadd.f32 %v87, %v88
    %vm90 = vcmp.ne.f32.partialorder %v89, 0.0
    %v91 = vsel %vm90, 1, 0
    %v92 = vcvt.s32.f32 %v91
    %s93 = sld [smem:[#allocation2]]
    %v94 = vmul.f32 %v81, %v92
    %v95 = vsel %vm82, %v94, 0.0
    %96 = vadd.xlane.f32.xlu0 %v95
    %v97 = vpop.xlane.xlu0 %96
    %v98 = vrot.slane %v97, 4
    %v99 = vadd.f32 %v97, %v98
    %v100 = vrot.slane %v99, 2
    %v101 = vadd.f32 %v99, %v100
    %v102 = vrot.slane %v101, 1
    %v103 = vadd.f32 %v101, %v102
    %s104 = vtos %v103
    %s105 = sadd.f32 %s93, %s104
    %s106 = scalar_lea.smem [#allocation2], 0
    %107 = sst [smem:[%s106]] %s105
    %s108 = sld [smem:[#allocation2 + $0x1]]
    %vm109 = vcmask 1040384
    %v110 = vsel %vm109, %v92, 0.0
    %111 = vadd.xlane.f32.xlu0 %v110
    %v112 = vpop.xlane.xlu0 %111
    %v113 = vrot.slane %v112, 4
    %v114 = vadd.f32 %v112, %v113
    %v115 = vrot.slane %v114, 2
    %v116 = vadd.f32 %v114, %v115
    %v117 = vrot.slane %v116, 1
    %v118 = vadd.f32 %v116, %v117
    %s119 = vtos %v118
    %s120 = smul.f32 %s119, 3.0
    %s121 = sadd.f32 %s108, %s120
    %s122 = scalar_lea.smem [#allocation2], 1
    %123 = sst [smem:[%s122]] %s121
    %v125 = vrot.slane %v64, 3
    %vm127 = vcmask 1044480
    %v128 = vsel %vm127, %v125, 0.0
    %v129 = vrot.slane %v128, 4
    %v130 = vadd.f32 %v128, %v129
    %v131 = vrot.slane %v130, 2
    %v132 = vadd.f32 %v130, %v131
    %v133 = vrot.slane %v132, 1
    %v134 = vadd.f32 %v132, %v133
    %vm135 = vcmp.ne.f32.partialorder %v134, 0.0
    %v136 = vsel %vm135, 1, 0
    %v137 = vcvt.s32.f32 %v136
    %s138 = sld [smem:[#allocation2 + $0x2]]
    %v139 = vmul.f32 %v81, %v137
    %v141 = vrot.slane %v139, 3
    %v143 = vsel %vm127, %v141, 0.0
    %144 = vadd.xlane.f32.xlu0 %v143
    %v145 = vpop.xlane.xlu0 %144
    %v146 = vrot.slane %v145, 4
    %v147 = vadd.f32 %v145, %v146
    %v148 = vrot.slane %v147, 2
    %v149 = vadd.f32 %v147, %v148
    %v150 = vrot.slane %v149, 1
    %v151 = vadd.f32 %v149, %v150
    %s152 = vtos %v151
    %s153 = sadd.f32 %s138, %s152
    %s154 = scalar_lea.smem [#allocation2], 2
    %155 = sst [smem:[%s154]] %s153
    %s156 = sld [smem:[#allocation2 + $0x3]]
    %v157 = vsel %vm109, %v137, 0.0
    %158 = vadd.xlane.f32.xlu0 %v157
    %v159 = vpop.xlane.xlu0 %158
    %v160 = vrot.slane %v159, 4
    %v161 = vadd.f32 %v159, %v160
    %v162 = vrot.slane %v161, 2
    %v163 = vadd.f32 %v161, %v162
    %v164 = vrot.slane %v163, 1
    %v165 = vadd.f32 %v163, %v164
    %s166 = vtos %v165
    %s167 = smul.f32 %s166, 5.0
    %s168 = sadd.f32 %s156, %s167
    %s169 = scalar_lea.smem [#allocation2], 3
    %170 = sst [smem:[%s169]] %s168
    %v171 = vld [vmem:[%s3] sm:$0x7]
    %v172 = vld [vmem:[%s4] sm:$0x7]
    %v173 = vld [vmem:[%s5] sm:$0x1]
    %v174 = vsel %vm82, %v171, -inf
    %v175 = vrot.slane %v174, 4
    %v176 = vmax.f32 %v174, %v175
    %v177 = vrot.slane %v176, 2
    %v178 = vmax.f32 %v176, %v177
    %v179 = vrot.slane %v178, 1
    %v180 = vmax.f32 %v178, %v179
    %v181 = vsub.f32 %v171, %v180
    %v182 = vmul.f32 %v181, 1.442695
    %v183 = vpow.pop %v182
    %v184 = vsel %vm82, %v183, 0.0
    %v185 = vrot.slane %v184, 4
    %v186 = vadd.f32 %v184, %v185
    %v187 = vrot.slane %v186, 2
    %v188 = vadd.f32 %v186, %v187
    %v189 = vrot.slane %v188, 1
    %v190 = vadd.f32 %v188, %v189
    %v191 = vlog2.pop %v190
    %v192 = vmul.f32 %v191, 0.6931472
    %v193 = vadd.f32 %v192, %v180
    %v194 = vsub.f32 %v193, %v171
    %v195 = vmul.f32 %v172, %v194
    %v196 = vsel %vm82, %v195, 0.0
    %v197 = vrot.slane %v196, 4
    %v198 = vadd.f32 %v196, %v197
    %v199 = vrot.slane %v198, 2
    %v200 = vadd.f32 %v198, %v199
    %v201 = vrot.slane %v200, 1
    %v202 = vadd.f32 %v200, %v201
    %s203 = sld [smem:[#allocation2 + $0x4]]
    %v204 = vmul.f32 %v202, %v173
    %v205 = vsel %vm109, %v204, 0.0
    %206 = vadd.xlane.f32.xlu0 %v205
    %v207 = vpop.xlane.xlu0 %206
    %v208 = vrot.slane %v207, 4
    %v209 = vadd.f32 %v207, %v208
    %v210 = vrot.slane %v209, 2
    %v211 = vadd.f32 %v209, %v210
    %v212 = vrot.slane %v211, 1
    %v213 = vadd.f32 %v211, %v212
    %s214 = vtos %v213
    %s215 = sadd.f32 %s203, %s214
    %s216 = scalar_lea.smem [#allocation2], 4
    %217 = sst [smem:[%s216]] %s215
    %s218 = sld [smem:[#allocation2 + $0x5]]
    %v219 = vsel %vm109, %v173, 0.0
    %220 = vadd.xlane.f32.xlu0 %v219
    %v221 = vpop.xlane.xlu0 %220
    %v222 = vrot.slane %v221, 4
    %v223 = vadd.f32 %v221, %v222
    %v224 = vrot.slane %v223, 2
    %v225 = vadd.f32 %v223, %v224
    %v226 = vrot.slane %v225, 1
    %v227 = vadd.f32 %v225, %v226
    %s228 = vtos %v227
    %s229 = sadd.f32 %s218, %s228
    %s230 = scalar_lea.smem [#allocation2], 5
    %231 = sst [smem:[%s230]] %s229
    // Predicated region
    $region42: #{_custom_loss_impl.1} parent=1 // pred_check
      %p232 = pneg %p43
    $region43: #{_custom_loss_impl.1} parent=1 // pred_check_branch
      %234 = sbr.rel (%p232) target = $region45
    $region44: #{_custom_loss_impl.1} parent=1 // pred_region
      %v235 = vld [vmem:[%s6] sm:$0x7]
      %v236 = vld [vmem:[%s7] sm:$0x7]
      %v237 = vsel %vm82, %v235, -inf
      %v238 = vrot.slane %v237, 4
      %v239 = vmax.f32 %v237, %v238
      %v240 = vrot.slane %v239, 2
      %v241 = vmax.f32 %v239, %v240
      %v242 = vrot.slane %v241, 1
      %v243 = vmax.f32 %v241, %v242
      %v244 = vsub.f32 %v235, %v243
      %v245 = vmul.f32 %v244, 1.442695
      %v246 = vpow.pop %v245
      %v247 = vsel %vm82, %v246, 0.0
      %v248 = vrot.slane %v247, 4
      %v249 = vadd.f32 %v247, %v248
      %v250 = vrot.slane %v249, 2
      %v251 = vadd.f32 %v249, %v250
      %v252 = vrot.slane %v251, 1
      %v253 = vadd.f32 %v251, %v252
      %v254 = vlog2.pop %v253
      %v255 = vmul.f32 %v254, 0.6931472
      %v256 = vadd.f32 %v255, %v243
      %v257 = vsub.f32 %v256, %v235
      %v258 = vmul.f32 %v236, %v257
      %v259 = vsel %vm82, %v258, 0.0
      %260 = vadd.xlane.f32.xlu0 %v259
      %v261 = vpop.xlane.xlu0 %260
      %v262 = vrot.slane %v261, 4
      %v263 = vadd.f32 %v261, %v262
      %v264 = vrot.slane %v263, 2
      %v265 = vadd.f32 %v263, %v264
      %v266 = vrot.slane %v265, 1
      %v267 = vadd.f32 %v265, %v266
      %s268 = vtos %v267
      %s269 = scalar_lea.smem [#allocation2], 6
      %270 = sst [smem:[%s269]] %s268
      %s271 = sld [smem:[#allocation3 + $0x4]]
      %s272 = sld [smem:[#allocation2]]
      %s273 = sld [smem:[#allocation2 + $0x1]]
      %s274 = sld [smem:[#allocation3]]
      %p275 = scmp.gt.f32.partialorder %s273, 0.0
      %v276 = vstv %s273
      %v277 = vrcp.pop %v276
      %s278 = vtos %v277
      %s279 = smul.f32 %s272, %s278
      %s280 = scalar_select %p275, %s279, 0.0
      %s281 = smul.f32 %s280, %s274
      %s282 = sld [smem:[#allocation2 + $0x2]]
      %s283 = sld [smem:[#allocation2 + $0x3]]
      %s284 = sld [smem:[#allocation3 + $0x1]]
      %p285 = scmp.gt.f32.partialorder %s283, 0.0
      %v286 = vstv %s283
      %v287 = vrcp.pop %v286
      %s288 = vtos %v287
      %s289 = smul.f32 %s282, %s288
      %s290 = scalar_select %p285, %s289, 0.0
      %s291 = smul.f32 %s290, %s284
      %s292 = sld [smem:[#allocation2 + $0x4]]
      %s293 = sld [smem:[#allocation2 + $0x5]]
      %s294 = sld [smem:[#allocation3 + $0x2]]
      %p295 = scmp.gt.f32.partialorder %s293, 0.0
      %v296 = vstv %s293
      %v297 = vrcp.pop %v296
      %s298 = vtos %v297
      %s299 = smul.f32 %s292, %s298
      %s300 = scalar_select %p295, %s299, 0.0
      %s301 = smul.f32 %s300, %s294
      %s302 = sld [smem:[#allocation2 + $0x6]]
      %s303 = sld [smem:[#allocation3 + $0x3]]
      %p304 = scmp.gt.f32.partialorder %s271, 0.0
      %v305 = vstv %s271
      %v306 = vrcp.pop %v305
      %s307 = vtos %v306
      %s308 = smul.f32 %s302, %s307
      %s309 = scalar_select %p304, %s308, 0.0
      %s310 = smul.f32 %s309, %s303
      %s311 = scalar_lea.smem [#allocation6], 0
      %312 = sst [smem:[%s311]] %s281
      %s313 = scalar_lea.smem [#allocation6], 1
      %314 = sst [smem:[%s313]] %s291
      %s315 = scalar_lea.smem [#allocation6], 2
      %316 = sst [smem:[%s315]] %s301
      %s317 = scalar_lea.smem [#allocation6], 3
      %318 = sst [smem:[%s317]] %s310
      %s319 = sadd.f32 %s281, %s291
      %s320 = sadd.f32 %s319, %s301
      %s321 = sadd.f32 %s320, %s310
      %s322 = smul.f32 %s321, 0.25
      %s323 = scalar_lea.smem [#allocation6], 4
      %324 = sst [smem:[%s323]] %s322
    $region45: #{_custom_loss_impl.1} parent=1 // pred_fallthru
      _
    // Predicated region
    $region46: #{_custom_loss_impl.1} parent=1 // pred_check
      _
    $region47: #{_custom_loss_impl.1} parent=1 // pred_check_branch
      %326 = sbr.rel (0) target = $region49
    $region48: #{_custom_loss_impl.1} parent=1 // pred_region
      %s328 = ssub.s32 16, 16
      %329 = vsyncadd [#allocation5], %s328
      %s331 = sshll.u32 %s8, 4
      %s332 = int_to_ptr.vmem [resolvable:$true] %s331
      %334 = dma.smem_to_vmem [#allocation6], 16, %s332, [#allocation5]
    $region49: #{_custom_loss_impl.1} parent=1 // pred_fallthru
      _
    // Predicated region
    $region50: #{_custom_loss_impl.1} parent=1 // pred_check
      _
    $region51: #{_custom_loss_impl.1} parent=1 // pred_check_branch
      %336 = sbr.rel (0) target = $region53
    $region52: #{_custom_loss_impl.1} parent=1 // pred_region
      %337 = dma.done [#allocation5], 16
    $region53: #{_custom_loss_impl.1} parent=1 // pred_fallthru
      _
    %338 = sfence
    %339 = vsyncpa [#allocation4], 1
    %340 = vsyncpa [#allocation5], 1

</llo_original>
